<compile_context>
chip_gen: v7x
topology: tpu7x:2x2x1
jax: 0.10.0
libtpu: 0.0.40
codegen_flags: <defaults>
</compile_context>

<pallas_src>
import jax
import jax.numpy as jnp
from jax.experimental import pallas as pl
from jax.experimental.pallas import tpu as pltpu


def _round_up(a, b):
    return (a + b - 1) // b * b


def _pick_tile(hw128, max_tile):
    """Pick a lane-dense tile (multiple of 128) <= max_tile that minimizes the
    padded spatial extent; on ties prefer the larger tile (fewer grid steps)."""
    max_t = min(max_tile, hw128)
    best_t, best_pad = 128, _round_up(hw128, 128)
    for t in range(128, max_t + 1, 128):
        padded = _round_up(hw128, t)
        if padded < best_pad or (padded == best_pad and t > best_t):
            best_pad, best_t = padded, t
    return best_t, best_pad


def outc_kernel(x_ref, w_ref, b_ref, o_ref):
    """One (batch, hw-tile) block of the 1x1 conv; channel reduction on VPU.

    x_ref : (C_in,  T) VMEM   lane-dense spatial tile
    w_ref : (C_out, C_in) SMEM
    b_ref : (C_out,)      SMEM
    o_ref : (C_out, T) VMEM   lane-dense output tile
    """
    c_out, c_in = w_ref.shape            # static python ints -> fully unrolled
    xb = x_ref[...].astype(jnp.float32)  # load input tile once: (C_in, T)
    rows = []
    for c in range(c_out):
        acc = xb[0:1, :] * w_ref[c, 0] + b_ref[c]          # bias fused in init
        for k in range(1, c_in):
            acc = acc + xb[k:k + 1, :] * w_ref[c, k]        # broadcast FMA (VPU)
        rows.append(acc)
    # Single dense block store (C_out, T) instead of C_out row stores.
    o_ref[...] = jnp.concatenate(rows, axis=0).astype(o_ref.dtype)


def outc_forward(x_nchw, weight, bias, *, max_tile_hw=4096):
    """1x1 conv forward (PyTorch OutC), NCHW in / NCHW out.

    x_nchw : (N, C_in, H, W)     float32
    weight : (C_out, C_in, 1, 1) float32  (PyTorch conv weight layout)
    bias   : (C_out,)            float32
    returns: (N, C_out, H, W)    float32
    """
    N, C_in, H, W = x_nchw.shape
    C_out = weight.shape[0]
    HW = H * W

    # Lane-dense tile; double-buffered VMEM use is 2*(C_in+C_out)*tile*4B,
    # i.e. ~230 KB at tile=4096 — negligible even on v7x's 64 MiB VMEM.
    HW128 = _round_up(HW, 128)
    tile, HW_pad = _pick_tile(HW128, max_tile_hw)

    x_flat = x_nchw.reshape(N, C_in, HW)            # contiguous reshape: free
    if HW_pad != HW:
        x_flat = jnp.pad(x_flat, ((0, 0), (0, 0), (0, HW_pad - HW)))

    w_mat = weight.reshape(C_out, C_in).astype(jnp.float32)
    b_vec = bias.reshape(C_out).astype(jnp.float32)

    grid = (N, HW_pad // tile)

    out_flat = pl.pallas_call(
        outc_kernel,
        out_shape=jax.ShapeDtypeStruct((N, C_out, HW_pad), x_nchw.dtype),
        grid=grid,
        in_specs=[
            # batch dim squeezed (None); C_in full; H*W tiled on lanes.
            pl.BlockSpec((None, C_in, tile), lambda n, t: (n, 0, t)),
            # tiny weight / bias: resident in SMEM, read as scalars.
            pl.BlockSpec(memory_space=pltpu.MemorySpace.SMEM),
            pl.BlockSpec(memory_space=pltpu.MemorySpace.SMEM),
        ],
        out_specs=pl.BlockSpec((None, C_out, tile), lambda n, t: (n, 0, t)),
        compiler_params=pltpu.CompilerParams(
            # both grid axes are independent -> shard across TensorCores.
            dimension_semantics=("parallel", "parallel"),
            vmem_limit_bytes=32 * 1024 * 1024,
        ),
    )(x_flat, w_mat, b_vec)

    if HW_pad != HW:
        out_flat = out_flat[:, :, :HW]
    return out_flat.reshape(N, C_out, H, W)


def _reference(x, weight, bias):
    C_out, C_in = weight.shape[0], weight.shape[1]
    return (jnp.einsum("nchw,oc->nohw", x, weight.reshape(C_out, C_in))
            + bias.reshape(1, C_out, 1, 1))


if __name__ == "__main__":
    # Small shapes consistent with the module: batch=2, in_channels=4,
    # out_channels=3, spatial=16x16.
    key = jax.random.PRNGKey(0)
    kx, kw, kb, kx2 = jax.random.split(key, 4)

    Nb, C_in, C_out, Hs, Ws = 2, 4, 3, 16, 16

    x = jax.random.normal(kx, (Nb, C_in, Hs, Ws), dtype=jnp.float32)
    weight = jax.random.normal(kw, (C_out, C_in, 1, 1), dtype=jnp.float32) * 0.1
    bias = jax.random.normal(kb, (C_out,), dtype=jnp.float32) * 0.1

    out = outc_forward(x, weight, bias)
    jax.block_until_ready(out)
    assert out.shape == (Nb, C_out, Hs, Ws)
    assert jnp.allclose(out, _reference(x, weight, bias), atol=1e-5, rtol=1e-5)

    # Also exercise the ragged-spatial (padded) path: H*W not a multiple of 128.
    x2 = jax.random.normal(kx2, (Nb, C_in, 10, 12), dtype=jnp.float32)
    out2 = outc_forward(x2, weight, bias)
    jax.block_until_ready(out2)
    assert out2.shape == (Nb, C_out, 10, 12)
    assert jnp.allclose(out2, _reference(x2, weight, bias), atol=1e-5, rtol=1e-5)

    print("KERNEL_OK")
</pallas_src>

<mosaic_0001>
module attributes {stable_mosaic.version = 11 : i64} {
  func.func @outc_kernel(%arg0: i32, %arg1: i32, %arg2: memref<1x4x256xf32, #tpu.memory_space<vmem>>, %arg3: memref<3x4xf32, #tpu.memory_space<smem>>, %arg4: memref<3xf32, #tpu.memory_space<smem>>, %arg5: memref<1x3x256xf32, #tpu.memory_space<vmem>>) attributes {dimension_semantics = [#tpu.dimension_semantics<parallel>, #tpu.dimension_semantics<parallel>], iteration_bounds = array<i64: 2, 1>, scalar_prefetch = 0 : i64, scratch_operands = 0 : i64, tpu.core_type = #tpu.core_type<tc>, window_params = [{transform_indices = @transform_0, window_bounds = array<i64: 1, 4, 256>}, {transform_indices = @transform_1, window_bounds = array<i64: 3, 4>}, {transform_indices = @transform_2, window_bounds = array<i64: 3>}, {transform_indices = @transform_3, window_bounds = array<i64: 1, 3, 256>}]} {
    %c0 = arith.constant 0 : index
    %c0_0 = arith.constant 0 : index
    %c0_1 = arith.constant 0 : index
    %0 = vector.load %arg2[%c0, %c0_0, %c0_1] : memref<1x4x256xf32, #tpu.memory_space<vmem>>, vector<1x4x256xf32>
    %1 = vector.shape_cast %0 : vector<1x4x256xf32> to vector<4x256xf32>
    %2 = vector.extract_strided_slice %1 {offsets = [0, 0], sizes = [1, 256], strides = [1, 1]} : vector<4x256xf32> to vector<1x256xf32>
    %c0_2 = arith.constant 0 : index
    %c0_3 = arith.constant 0 : index
    %3 = memref.load %arg3[%c0_2, %c0_3] : memref<3x4xf32, #tpu.memory_space<smem>>
    %4 = vector.broadcast %3 : f32 to vector<1x256xf32>
    %5 = arith.mulf %2, %4 : vector<1x256xf32>
    %c0_4 = arith.constant 0 : index
    %6 = memref.load %arg4[%c0_4] : memref<3xf32, #tpu.memory_space<smem>>
    %7 = vector.broadcast %6 : f32 to vector<1x256xf32>
    %8 = arith.addf %5, %7 : vector<1x256xf32>
    %9 = vector.extract_strided_slice %1 {offsets = [1, 0], sizes = [1, 256], strides = [1, 1]} : vector<4x256xf32> to vector<1x256xf32>
    %c0_5 = arith.constant 0 : index
    %c1 = arith.constant 1 : index
    %10 = memref.load %arg3[%c0_5, %c1] : memref<3x4xf32, #tpu.memory_space<smem>>
    %11 = vector.broadcast %10 : f32 to vector<1x256xf32>
    %12 = arith.mulf %9, %11 : vector<1x256xf32>
    %13 = arith.addf %8, %12 : vector<1x256xf32>
    %14 = vector.extract_strided_slice %1 {offsets = [2, 0], sizes = [1, 256], strides = [1, 1]} : vector<4x256xf32> to vector<1x256xf32>
    %c0_6 = arith.constant 0 : index
    %c2 = arith.constant 2 : index
    %15 = memref.load %arg3[%c0_6, %c2] : memref<3x4xf32, #tpu.memory_space<smem>>
    %16 = vector.broadcast %15 : f32 to vector<1x256xf32>
    %17 = arith.mulf %14, %16 : vector<1x256xf32>
    %18 = arith.addf %13, %17 : vector<1x256xf32>
    %19 = vector.extract_strided_slice %1 {offsets = [3, 0], sizes = [1, 256], strides = [1, 1]} : vector<4x256xf32> to vector<1x256xf32>
    %c0_7 = arith.constant 0 : index
    %c3 = arith.constant 3 : index
    %20 = memref.load %arg3[%c0_7, %c3] : memref<3x4xf32, #tpu.memory_space<smem>>
    %21 = vector.broadcast %20 : f32 to vector<1x256xf32>
    %22 = arith.mulf %19, %21 : vector<1x256xf32>
    %23 = arith.addf %18, %22 : vector<1x256xf32>
    %24 = vector.extract_strided_slice %1 {offsets = [0, 0], sizes = [1, 256], strides = [1, 1]} : vector<4x256xf32> to vector<1x256xf32>
    %c1_8 = arith.constant 1 : index
    %c0_9 = arith.constant 0 : index
    %25 = memref.load %arg3[%c1_8, %c0_9] : memref<3x4xf32, #tpu.memory_space<smem>>
    %26 = vector.broadcast %25 : f32 to vector<1x256xf32>
    %27 = arith.mulf %24, %26 : vector<1x256xf32>
    %c1_10 = arith.constant 1 : index
    %28 = memref.load %arg4[%c1_10] : memref<3xf32, #tpu.memory_space<smem>>
    %29 = vector.broadcast %28 : f32 to vector<1x256xf32>
    %30 = arith.addf %27, %29 : vector<1x256xf32>
    %31 = vector.extract_strided_slice %1 {offsets = [1, 0], sizes = [1, 256], strides = [1, 1]} : vector<4x256xf32> to vector<1x256xf32>
    %c1_11 = arith.constant 1 : index
    %c1_12 = arith.constant 1 : index
    %32 = memref.load %arg3[%c1_11, %c1_12] : memref<3x4xf32, #tpu.memory_space<smem>>
    %33 = vector.broadcast %32 : f32 to vector<1x256xf32>
    %34 = arith.mulf %31, %33 : vector<1x256xf32>
    %35 = arith.addf %30, %34 : vector<1x256xf32>
    %36 = vector.extract_strided_slice %1 {offsets = [2, 0], sizes = [1, 256], strides = [1, 1]} : vector<4x256xf32> to vector<1x256xf32>
    %c1_13 = arith.constant 1 : index
    %c2_14 = arith.constant 2 : index
    %37 = memref.load %arg3[%c1_13, %c2_14] : memref<3x4xf32, #tpu.memory_space<smem>>
    %38 = vector.broadcast %37 : f32 to vector<1x256xf32>
    %39 = arith.mulf %36, %38 : vector<1x256xf32>
    %40 = arith.addf %35, %39 : vector<1x256xf32>
    %41 = vector.extract_strided_slice %1 {offsets = [3, 0], sizes = [1, 256], strides = [1, 1]} : vector<4x256xf32> to vector<1x256xf32>
    %c1_15 = arith.constant 1 : index
    %c3_16 = arith.constant 3 : index
    %42 = memref.load %arg3[%c1_15, %c3_16] : memref<3x4xf32, #tpu.memory_space<smem>>
    %43 = vector.broadcast %42 : f32 to vector<1x256xf32>
    %44 = arith.mulf %41, %43 : vector<1x256xf32>
    %45 = arith.addf %40, %44 : vector<1x256xf32>
    %46 = vector.extract_strided_slice %1 {offsets = [0, 0], sizes = [1, 256], strides = [1, 1]} : vector<4x256xf32> to vector<1x256xf32>
    %c2_17 = arith.constant 2 : index
    %c0_18 = arith.constant 0 : index
    %47 = memref.load %arg3[%c2_17, %c0_18] : memref<3x4xf32, #tpu.memory_space<smem>>
    %48 = vector.broadcast %47 : f32 to vector<1x256xf32>
    %49 = arith.mulf %46, %48 : vector<1x256xf32>
    %c2_19 = arith.constant 2 : index
    %50 = memref.load %arg4[%c2_19] : memref<3xf32, #tpu.memory_space<smem>>
    %51 = vector.broadcast %50 : f32 to vector<1x256xf32>
    %52 = arith.addf %49, %51 : vector<1x256xf32>
    %53 = vector.extract_strided_slice %1 {offsets = [1, 0], sizes = [1, 256], strides = [1, 1]} : vector<4x256xf32> to vector<1x256xf32>
    %c2_20 = arith.constant 2 : index
    %c1_21 = arith.constant 1 : index
    %54 = memref.load %arg3[%c2_20, %c1_21] : memref<3x4xf32, #tpu.memory_space<smem>>
    %55 = vector.broadcast %54 : f32 to vector<1x256xf32>
    %56 = arith.mulf %53, %55 : vector<1x256xf32>
    %57 = arith.addf %52, %56 : vector<1x256xf32>
    %58 = vector.extract_strided_slice %1 {offsets = [2, 0], sizes = [1, 256], strides = [1, 1]} : vector<4x256xf32> to vector<1x256xf32>
    %c2_22 = arith.constant 2 : index
    %c2_23 = arith.constant 2 : index
    %59 = memref.load %arg3[%c2_22, %c2_23] : memref<3x4xf32, #tpu.memory_space<smem>>
    %60 = vector.broadcast %59 : f32 to vector<1x256xf32>
    %61 = arith.mulf %58, %60 : vector<1x256xf32>
    %62 = arith.addf %57, %61 : vector<1x256xf32>
    %63 = vector.extract_strided_slice %1 {offsets = [3, 0], sizes = [1, 256], strides = [1, 1]} : vector<4x256xf32> to vector<1x256xf32>
    %c2_24 = arith.constant 2 : index
    %c3_25 = arith.constant 3 : index
    %64 = memref.load %arg3[%c2_24, %c3_25] : memref<3x4xf32, #tpu.memory_space<smem>>
    %65 = vector.broadcast %64 : f32 to vector<1x256xf32>
    %66 = arith.mulf %63, %65 : vector<1x256xf32>
    %67 = arith.addf %62, %66 : vector<1x256xf32>
    %68 = tpu.concatenate %23, %45, %67 in 0 : vector<1x256xf32>, vector<1x256xf32>, vector<1x256xf32> -> vector<3x256xf32>
    %c0_26 = arith.constant 0 : index
    %c0_27 = arith.constant 0 : index
    %c0_28 = arith.constant 0 : index
    %69 = vector.load %arg5[%c0_26, %c0_27, %c0_28] : memref<1x3x256xf32, #tpu.memory_space<vmem>>, vector<1x3x256xf32>
    %70 = vector.shape_cast %69 : vector<1x3x256xf32> to vector<3x256xf32>
    %71 = vector.shape_cast %68 : vector<3x256xf32> to vector<1x3x256xf32>
    tpu.vector_store %arg5[%c0_26, %c0_27, %c0_28], %71 {strides = array<i32>} : memref<1x3x256xf32, #tpu.memory_space<vmem>>, vector<1x3x256xf32>,
    return
  }
  func.func @transform_0(%arg0: i32, %arg1: i32) -> (i32, i32, i32) {
    %c0_i32 = arith.constant 0 : i32
    %c0_i32_0 = arith.constant 0 : i32
    return %arg0, %c0_i32, %arg1 : i32, i32, i32
  }
  func.func @transform_1(%arg0: i32, %arg1: i32) -> (i32, i32) {
    %c0_i32 = arith.constant 0 : i32
    %c0_i32_0 = arith.constant 0 : i32
    %c0_i32_1 = arith.constant 0 : i32
    return %c0_i32, %c0_i32_0 : i32, i32
  }
  func.func @transform_2(%arg0: i32, %arg1: i32) -> i32 {
    %c0_i32 = arith.constant 0 : i32
    %c0_i32_0 = arith.constant 0 : i32
    return %c0_i32 : i32
  }
  func.func @transform_3(%arg0: i32, %arg1: i32) -> (i32, i32, i32) {
    %c0_i32 = arith.constant 0 : i32
    %c0_i32_0 = arith.constant 0 : i32
    return %arg0, %c0_i32, %arg1 : i32, i32, i32
  }
}

</mosaic_0001>

<llo_original>
// kernel: tpu_custom_call.1
$region0: #{tpu_custom_call.1}
  #allocation0 [shape = 'u32[]', space=smem, size = 0x4, offset = 0x4, fixed_abs, tag = 'smem constant byte address 0x4 - core index']
  #allocation1 [shape = 'u32[144,128]{1,0:T(1,128)}', space=vmem, size = 0x12000, scoped, tag = 'internal scratch']
  %s0 = inlined_call_operand.hbm [shape: f32[2,4,256], index: 0, kind: input, shape index: {}]
  %s1 = inlined_call_operand.hbm [shape: f32[3,4], index: 1, kind: input, shape index: {}]
  %s2 = inlined_call_operand.vmem [shape: f32[3], index: 2, kind: input, shape index: {}]
  %s3 = inlined_call_operand.vmem [shape: f32[2,3,256], index: 3, kind: output, shape index: {}]
  %s4 = sld [smem:[#allocation0]]
  $region57: #{tpu_custom_call.1} parent=0
    _
  %s6 = ssub.s32 1, %s4
  %s7 = scalar_select 0, %s6, %s4
  $region1: #{tpu_custom_call.1} parent=0
    #allocation2 [shape = 'u8[8192]{0}', space=vmem, size = 0x2000, scoped, tag = 'input window, operand 0']
    #allocation3 [shape = 's32[2]{0}', space=sflag, size = 0x8, scoped, tag = 'scoped memory for tpu_custom_call.1']
    #allocation4 [shape = 's32[2]{0}', space=sflag, size = 0x8, scoped, tag = 'scoped memory for tpu_custom_call.1']
    #allocation5 [shape = 's32[2]{0}', space=sflag, size = 0x8, scoped, tag = 'scoped memory for tpu_custom_call.1']
    #allocation6 [shape = 'u8[2048]{0}', space=smem, size = 0x800, scoped, tag = 'input window, operand 1, single buffered']
    #allocation7 [shape = 'u8[512]{0}', space=smem, size = 0x200, scoped, tag = 'input window, operand 2, single buffered']
    %8 = vsyncpa [#allocation3], 0
    %s9 = scalar_lea.sflag [#allocation3], 1
    %10 = vsyncpa %s9, 0
    %11 = vsyncpa [#allocation4], 0
    %12 = vsyncpa [#allocation5], 0
    loop: start=0, step=1, limit=4
    $region2: #{tpu_custom_call.1} parent=1 // loop_pre_header
      _
    $region3: #{tpu_custom_call.1} parent=1 // loop_header
      %s14 = sphi 0, %s18
      %p15 = scmp.ge.s32.totalorder %s14, 4
      %s21 = sphi 0, %s33
      %s22 = sphi 0, %s29
      %s23 = sphi 0, %s21
      %s24 = sphi 0, %s22
      %s25 = sphi 0, %s23
      %s26 = sphi 0, %s24
      %s38 = sphi 0, %s40
      %s41 = sphi 0, %s38
      %s42 = sphi 0, %s41
      %s58 = sphi 0, %s42
      %s62 = sphi 0, %s62
      %s64 = sphi 0, %s62
      %s65 = sphi 0, %s64
      %s79 = sphi 0, %s65
      %s83 = sphi 0, %s83
      %s85 = sphi 0, %s83
      %s86 = sphi 0, %s85
      %s100 = sphi 0, %s86
      %s108 = sphi 0, %s110
      %s111 = sphi 0, %s108
      %s112 = sphi 0, %s111
      %s128 = sphi 0, %s112
    $region4: #{tpu_custom_call.1} parent=1 // loop_header_branch
      %17 = sbr.rel (%p15) target = $region8
    $region5: #{tpu_custom_call.1} parent=1 // loop_body
      %s19 = ssub.s32 %s14, 1
      %s20 = ssub.s32 %s14, 2
      %s27 = sadd.s32 1, %s22
      %p28 = scmp.ge.s32.totalorder %s27, 1
      %s29 = scalar_select %p28, 0, %s27
      %s30 = sadd.s32 1, %s21
      %s31 = scalar_select %p28, %s30, %s21
      %p32 = scmp.ge.s32.totalorder %s31, 2
      %s33 = scalar_select %p32, 0, %s31
      %s34 = ssub.s32 %s21, %s33
      %s35 = ssub.s32 %s22, %s29
      %s36 = sor.u32 %s34, %s35
      %p37 = scmp.eq.s32.totalorder %s36, 0
      %s39 = sadd.s32 %s38, 1
      %s40 = scalar_select %p37, %s38, %s39
      %p43 = pneg %p37
      %p44 = scmp.eq.s32.totalorder %s14, 1
      %p45 = por %p43, %p44
      %p46 = scmp.ne.s32.totalorder %s38, %s41
      %p47 = scmp.eq.s32.totalorder %s14, 0
      %p48 = por %p46, %p47
      %p49 = scmp.ne.s32.totalorder %s38, %s41
      %p50 = scmp.eq.s32.totalorder %s19, 1
      %p51 = por %p49, %p50
      %p52 = scmp.ne.s32.totalorder %s41, %s42
      %p53 = scmp.eq.s32.totalorder %s19, 0
      %p54 = por %p52, %p53
      %p55 = scmp.ne.s32.totalorder %s41, %s42
      %p56 = scmp.eq.s32.totalorder %s20, 1
      %p57 = por %p55, %p56
      %p59 = scmp.ne.s32.totalorder %s42, %s58
      %p60 = scmp.eq.s32.totalorder %s20, 0
      %p61 = por %p59, %p60
      %s63 = sadd.s32 %s62, 1
      %p66 = scmp.eq.s32.totalorder %s14, 1
      %p67 = scmp.ne.s32.totalorder %s62, %s64
      %p68 = scmp.eq.s32.totalorder %s14, 0
      %p69 = por %p67, %p68
      %p70 = scmp.ne.s32.totalorder %s62, %s64
      %p71 = scmp.eq.s32.totalorder %s19, 1
      %p72 = por %p70, %p71
      %p73 = scmp.ne.s32.totalorder %s64, %s65
      %p74 = scmp.eq.s32.totalorder %s19, 0
      %p75 = por %p73, %p74
      %p76 = scmp.ne.s32.totalorder %s64, %s65
      %p77 = scmp.eq.s32.totalorder %s20, 1
      %p78 = por %p76, %p77
      %p80 = scmp.ne.s32.totalorder %s65, %s79
      %p81 = scmp.eq.s32.totalorder %s20, 0
      %p82 = por %p80, %p81
      %s84 = sadd.s32 %s83, 1
      %p87 = scmp.eq.s32.totalorder %s14, 1
      %p88 = scmp.ne.s32.totalorder %s83, %s85
      %p89 = scmp.eq.s32.totalorder %s14, 0
      %p90 = por %p88, %p89
      %p91 = scmp.ne.s32.totalorder %s83, %s85
      %p92 = scmp.eq.s32.totalorder %s19, 1
      %p93 = por %p91, %p92
      %p94 = scmp.ne.s32.totalorder %s85, %s86
      %p95 = scmp.eq.s32.totalorder %s19, 0
      %p96 = por %p94, %p95
      %p97 = scmp.ne.s32.totalorder %s85, %s86
      %p98 = scmp.eq.s32.totalorder %s20, 1
      %p99 = por %p97, %p98
      %p101 = scmp.ne.s32.totalorder %s86, %s100
      %p102 = scmp.eq.s32.totalorder %s20, 0
      %p103 = por %p101, %p102
      %s104 = ssub.s32 %s21, %s33
      %s105 = ssub.s32 %s22, %s29
      %s106 = sor.u32 %s104, %s105
      %p107 = scmp.eq.s32.totalorder %s106, 0
      %s109 = sadd.s32 %s108, 1
      %s110 = scalar_select %p107, %s108, %s109
      %p113 = pneg %p107
      %p114 = scmp.eq.s32.totalorder %s14, 1
      %p115 = por %p113, %p114
      %p116 = scmp.ne.s32.totalorder %s108, %s111
      %p117 = scmp.eq.s32.totalorder %s14, 0
      %p118 = por %p116, %p117
      %p119 = scmp.ne.s32.totalorder %s108, %s111
      %p120 = scmp.eq.s32.totalorder %s19, 1
      %p121 = por %p119, %p120
      %p122 = scmp.ne.s32.totalorder %s111, %s112
      %p123 = scmp.eq.s32.totalorder %s19, 0
      %p124 = por %p122, %p123
      %p125 = scmp.ne.s32.totalorder %s111, %s112
      %p126 = scmp.eq.s32.totalorder %s20, 1
      %p127 = por %p125, %p126
      %p129 = scmp.ne.s32.totalorder %s112, %s128
      %p130 = scmp.eq.s32.totalorder %s20, 0
      %p131 = por %p129, %p130
      %p132 = scmp.le.s32.totalorder 1, %s14
      %p133 = scmp.lt.s32.totalorder %s14, 3
      %p134 = pnand %p132, %p133
      %p135 = pneg %p134
      // Predicated region
      $region9: #{tpu_custom_call.1} parent=5 // pred_check
        _
      $region10: #{tpu_custom_call.1} parent=5 // pred_check_branch
        %137 = sbr.rel (%p134) target = $region12
      $region11: #{tpu_custom_call.1} parent=5 // pred_region
        %s138 = ssub.s32 %s14, 1
        // Predicated region
        $region13: #{tpu_custom_call.1} parent=11 // pred_check
          %p139 = pneg %p75
        $region14: #{tpu_custom_call.1} parent=11 // pred_check_branch
          %141 = sbr.rel (%p139) target = $region16
        $region15: #{tpu_custom_call.1} parent=11 // pred_region
          %s143 = ssub.s32 64, 64
          %144 = vsyncadd [#allocation4], %s143
          %147 = dma.hbm_to_smem %s1, 64, [#allocation6], [#allocation4]
        $region16: #{tpu_custom_call.1} parent=11 // pred_fallthru
          _
        // Predicated region
        $region17: #{tpu_custom_call.1} parent=11 // pred_check
          %p148 = pneg %p96
        $region18: #{tpu_custom_call.1} parent=11 // pred_check_branch
          %150 = sbr.rel (%p148) target = $region20
        $region19: #{tpu_custom_call.1} parent=11 // pred_region
          %s152 = ssub.s32 16, 16
          %153 = vsyncadd [#allocation5], %s152
          %s155 = sshll.u32 %s2, 4
          %s156 = int_to_ptr.vmem [resolvable:$true] %s155
          %158 = dma.vmem_to_smem %s156, 16, [#allocation7], [#allocation5]
        $region20: #{tpu_custom_call.1} parent=11 // pred_fallthru
          _
      $region12: #{tpu_custom_call.1} parent=5 // pred_fallthru
        _
      %p159 = scmp.lt.s32.totalorder %s14, 2
      // Predicated region
      $region21: #{tpu_custom_call.1} parent=5 // pred_check
        %p160 = pneg %p159
      $region22: #{tpu_custom_call.1} parent=5 // pred_check_branch
        %162 = sbr.rel (%p160) target = $region24
      $region23: #{tpu_custom_call.1} parent=5 // pred_region
        // Predicated region
        $region25: #{tpu_custom_call.1} parent=23 // pred_check
          %p163 = pneg %p48
        $region26: #{tpu_custom_call.1} parent=23 // pred_check_branch
          %165 = sbr.rel (%p163) target = $region28
        $region27: #{tpu_custom_call.1} parent=23 // pred_region
          %s166 = sand.u32 %s38, 1
          %s167 = scalar_lea.sflag [#allocation3], %s166
          %s168 = sand.u32 %s38, 1
          %s169 = smul.addr %s168, 8
          %s170 = scalar_lea.vmem [#allocation2], %s169
          %s171 = smul.u32 2, %s22
          %s173 = ssub.s32 128, 128
          %174 = vsyncadd %s167, %s173
          %s175 = smul.addr %s21, 2
          %s176 = sadd.s32 %s171, %s175
          %s177 = smul.addr %s176, 64
          %s178 = scalar_lea.hbm %s0, %s177
          %s180 = sshll.u32 %s170, 4
          %s181 = int_to_ptr.vmem [resolvable:$true] %s180
          %183 = dma.hbm_to_vmem [thread:$0]  %s178, 128, %s181, %s167
        $region28: #{tpu_custom_call.1} parent=23 // pred_fallthru
          _
      $region24: #{tpu_custom_call.1} parent=5 // pred_fallthru
        _
      %p184 = scmp.le.s32.totalorder 1, %s14
      %p185 = scmp.lt.s32.totalorder %s14, 3
      %p186 = pnand %p184, %p185
      %p187 = pneg %p186
      // Predicated region
      $region29: #{tpu_custom_call.1} parent=5 // pred_check
        _
      $region30: #{tpu_custom_call.1} parent=5 // pred_check_branch
        %189 = sbr.rel (%p186) target = $region32
      $region31: #{tpu_custom_call.1} parent=5 // pred_region
        %s190 = ssub.s32 %s14, 1
        %s191 = sand.u32 %s41, 1
        %s192 = scalar_lea.sflag [#allocation3], %s191
        %s193 = sand.u32 %s41, 1
        %s194 = smul.addr %s193, 8
        %s195 = scalar_lea.vmem [#allocation2], %s194
        // Predicated region
        $region33: #{tpu_custom_call.1} parent=31 // pred_check
          %p196 = pneg %p54
        $region34: #{tpu_custom_call.1} parent=31 // pred_check_branch
          %198 = sbr.rel (%p196) target = $region36
        $region35: #{tpu_custom_call.1} parent=31 // pred_region
          %199 = dma.done %s192, 128
        $region36: #{tpu_custom_call.1} parent=31 // pred_fallthru
          _
        // Predicated region
        $region37: #{tpu_custom_call.1} parent=31 // pred_check
          %p200 = pneg %p75
        $region38: #{tpu_custom_call.1} parent=31 // pred_check_branch
          %202 = sbr.rel (%p200) target = $region40
        $region39: #{tpu_custom_call.1} parent=31 // pred_region
          %203 = dma.done [#allocation4], 64
        $region40: #{tpu_custom_call.1} parent=31 // pred_fallthru
          _
        // Predicated region
        $region41: #{tpu_custom_call.1} parent=31 // pred_check
          %p204 = pneg %p96
        $region42: #{tpu_custom_call.1} parent=31 // pred_check_branch
          %206 = sbr.rel (%p204) target = $region44
        $region43: #{tpu_custom_call.1} parent=31 // pred_region
          %207 = dma.done [#allocation5], 16
        $region44: #{tpu_custom_call.1} parent=31 // pred_fallthru
          _
        %208 = sfence
        %s209 = sand.u32 %s41, 1
        %s210 = scalar_lea.sflag [#allocation3], %s209
        %s211 = sand.u32 %s41, 1
        %s212 = smul.addr %s211, 8
        %s213 = scalar_lea.vmem [#allocation2], %s212
        %p214 = pneg %p54
        %p215 = pneg %p51
        %p216 = pneg %p75
        %p217 = pneg %p72
        %p218 = pneg %p96
        %p219 = pneg %p93
        %p220 = pneg %p124
        %p221 = pneg %p121
        %s222 = smul.u32 2, %s24
        %p223 = scmp.lt.s32.totalorder %s23, 1
        %s224 = scalar_select %p223, %s23, 1
        %p225 = scmp.lt.s32.totalorder %s222, 1
        %s226 = scalar_select %p225, %s222, 1
        %s227 = smul.addr %s224, 2
        %s228 = sadd.s32 %s226, %s227
        %s229 = smul.addr %s228, 4
        %s230 = scalar_lea.vmem %s3, %s229
        %s231 = smul.u32 2, %s24
        %s232 = smul.u32 2, %s24
        %p233 = scmp.lt.s32.totalorder %s23, 1
        %s234 = scalar_select %p233, %s23, 1
        %p235 = scmp.lt.s32.totalorder %s232, 1
        %s236 = scalar_select %p235, %s232, 1
        %s237 = smul.addr %s234, 2
        %s238 = sadd.s32 %s236, %s237
        %s239 = smul.addr %s238, 4
        %s240 = scalar_lea.vmem %s3, %s239
        %s241 = smul.u32 2, %s24
        %v242 = vld [vmem:[%s195] sm:$0xff]
        %s243 = sld [smem:[#allocation6]]
        %v244 = vstv %s243
        %v245 = vmul.f32 %v242, %v244
        %s246 = sld [smem:[#allocation7]]
        %v247 = vstv %s246
        %v248 = vadd.f32 %v245, %v247
        %s249 = sld [smem:[#allocation6 + $0x1]]
        %v250 = vstv %s249
        %v251 = vmul.f32 %v242, %v250
        %v253 = vrot.slane %v251, 5
        %v254 = vrot.slane %v253, 4
        %v256 = vadd.f32 %v248, %v254
        %s257 = sld [smem:[#allocation6 + $0x2]]
        %v258 = vstv %s257
        %v259 = vmul.f32 %v242, %v258
        %v261 = vrot.slane %v259, 6
        %v262 = vrot.slane %v261, 4
        %v264 = vadd.f32 %v256, %v262
        %s265 = sld [smem:[#allocation6 + $0x3]]
        %v266 = vstv %s265
        %v267 = vmul.f32 %v242, %v266
        %v269 = vrot.slane %v267, 7
        %v270 = vrot.slane %v269, 4
        %v272 = vadd.f32 %v264, %v270
        %s273 = sld [smem:[#allocation6 + $0x80]]
        %v274 = vstv %s273
        %v275 = vmul.f32 %v242, %v274
        %s276 = sld [smem:[#allocation7 + $0x1]]
        %v277 = vstv %s276
        %v278 = vadd.f32 %v275, %v277
        %s279 = sld [smem:[#allocation6 + $0x81]]
        %v280 = vstv %s279
        %v281 = vmul.f32 %v242, %v280
        %v283 = vrot.slane %v281, 5
        %v284 = vrot.slane %v283, 4
        %v286 = vadd.f32 %v278, %v284
        %s287 = sld [smem:[#allocation6 + $0x82]]
        %v288 = vstv %s287
        %v289 = vmul.f32 %v242, %v288
        %v291 = vrot.slane %v289, 6
        %v292 = vrot.slane %v291, 4
        %v294 = vadd.f32 %v286, %v292
        %s295 = sld [smem:[#allocation6 + $0x83]]
        %v296 = vstv %s295
        %v297 = vmul.f32 %v242, %v296
        %v299 = vrot.slane %v297, 7
        %v300 = vrot.slane %v299, 4
        %v302 = vadd.f32 %v294, %v300
        %s303 = sld [smem:[#allocation6 + $0x100]]
        %v304 = vstv %s303
        %v305 = vmul.f32 %v242, %v304
        %s306 = sld [smem:[#allocation7 + $0x2]]
        %v307 = vstv %s306
        %v308 = vadd.f32 %v305, %v307
        %s309 = sld [smem:[#allocation6 + $0x101]]
        %v310 = vstv %s309
        %v311 = vmul.f32 %v242, %v310
        %v313 = vrot.slane %v311, 5
        %v314 = vrot.slane %v313, 4
        %v316 = vadd.f32 %v308, %v314
        %s317 = sld [smem:[#allocation6 + $0x102]]
        %v318 = vstv %s317
        %v319 = vmul.f32 %v242, %v318
        %v321 = vrot.slane %v319, 6
        %v322 = vrot.slane %v321, 4
        %v324 = vadd.f32 %v316, %v322
        %s325 = sld [smem:[#allocation6 + $0x103]]
        %v326 = vstv %s325
        %v327 = vmul.f32 %v242, %v326
        %v329 = vrot.slane %v327, 7
        %v330 = vrot.slane %v329, 4
        %v332 = vadd.f32 %v324, %v330
        %v334 = vlaneseq
        %v335 = vshrl.u32 %v334, 7
        %v336 = vsub.s32 0, %v335
        %v337 = vrot.slane %v272, %v336
        %v338 = vlaneseq
        %v339 = vshrl.u32 %v338, 7
        %v340 = vsub.s32 4, %v339
        %v341 = vrot.slane %v272, %v340
        %v345 = vlaneseq
        %v346 = vshrl.u32 %v345, 7
        %v347 = vsub.s32 0, %v346
        %v348 = vrot.slane %v302, %v347
        %v349 = vlaneseq
        %v350 = vshrl.u32 %v349, 7
        %v351 = vsub.s32 4, %v350
        %v352 = vrot.slane %v302, %v351
        %v356 = vlaneseq
        %v357 = vshrl.u32 %v356, 7
        %v358 = vsub.s32 0, %v357
        %v359 = vrot.slane %v332, %v358
        %v360 = vlaneseq
        %v361 = vshrl.u32 %v360, 7
        %v362 = vsub.s32 4, %v361
        %v363 = vrot.slane %v332, %v362
        %vm366 = vcmask 1040384
        %v367 = vsel %vm366, %v337, %v348
        %v368 = vsel %vm366, %v341, %v352
        %vm369 = vcmask 1041408
        %v370 = vsel %vm369, %v367, %v359
        %v371 = vsel %vm369, %v368, %v363
        %v374 = vcombine.low %v370, %v371
        %376 = vst [vmem:[%s240] sm:$0x77] %v374
        %s377 = smul.u32 2, %s24
        %p378 = scmp.lt.s32.totalorder %s23, 1
        %s379 = scalar_select %p378, %s23, 1
        %p380 = scmp.lt.s32.totalorder %s377, 1
        %s381 = scalar_select %p380, %s377, 1
        %s382 = smul.addr %s379, 2
        %s383 = sadd.s32 %s381, %s382
        %s384 = smul.addr %s383, 4
        %s385 = scalar_lea.vmem %s3, %s384
        // Predicated region
        $region45: #{tpu_custom_call.1} parent=31 // pred_check
          %p386 = pneg %p121
        $region46: #{tpu_custom_call.1} parent=31 // pred_check_branch
          %388 = sbr.rel (%p386) target = $region48
        $region47: #{tpu_custom_call.1} parent=31 // pred_region
          %s389 = smul.u32 2, %s24
        $region48: #{tpu_custom_call.1} parent=31 // pred_fallthru
          _
      $region32: #{tpu_custom_call.1} parent=5 // pred_fallthru
        _
      %p390 = scmp.le.s32.totalorder 2, %s14
      // Predicated region
      $region49: #{tpu_custom_call.1} parent=5 // pred_check
        %p391 = pneg %p390
      $region50: #{tpu_custom_call.1} parent=5 // pred_check_branch
        %393 = sbr.rel (%p391) target = $region52
      $region51: #{tpu_custom_call.1} parent=5 // pred_region
        %s394 = ssub.s32 %s14, 2
        // Predicated region
        $region53: #{tpu_custom_call.1} parent=51 // pred_check
          %p395 = pneg %p127
        $region54: #{tpu_custom_call.1} parent=51 // pred_check_branch
          %397 = sbr.rel (%p395) target = $region56
        $region55: #{tpu_custom_call.1} parent=51 // pred_region
          %s398 = smul.u32 2, %s26
          %p399 = scmp.lt.s32.totalorder %s25, 1
          %s400 = scalar_select %p399, %s25, 1
          %p401 = scmp.lt.s32.totalorder %s398, 1
          %s402 = scalar_select %p401, %s398, 1
          %s403 = smul.addr %s400, 2
          %s404 = sadd.s32 %s402, %s403
          %s405 = smul.addr %s404, 4
          %s406 = scalar_lea.vmem %s3, %s405
        $region56: #{tpu_custom_call.1} parent=51 // pred_fallthru
          _
      $region52: #{tpu_custom_call.1} parent=5 // pred_fallthru
        _
    $region6: #{tpu_custom_call.1} parent=1 // loop_footer
      %s18 = sadd.s32 1, %s14
    $region7: #{tpu_custom_call.1} parent=1 // loop_footer_branch
      %13 = sbr.rel target = $region3
    $region8: #{tpu_custom_call.1} parent=1 // loop_exit
      _
    %407 = vsyncpa [#allocation3], 1
    %s408 = scalar_lea.sflag [#allocation3], 1
    %409 = vsyncpa %s408, 1
    %410 = vsyncpa [#allocation4], 1
    %s411 = scalar_lea.sflag [#allocation4], 1
    %412 = vsyncpa %s411, 1
    %413 = vsyncpa [#allocation5], 1
    %s414 = scalar_lea.sflag [#allocation5], 1
    %415 = vsyncpa %s414, 1

</llo_original>
